<compile_context>
chip_gen: v7x
topology: tpu7x:2x2x1
jax: 0.10.0
libtpu: 0.0.40
codegen_flags: <defaults>
</compile_context>

<pallas_src>
import functools

import jax
import jax.numpy as jnp
from jax.experimental import pallas as pl
from jax.experimental.pallas import tpu as pltpu


def latent_classifier_kernel(x_ref, wc_ref, w2_ref, bias_ref, out_ref):
    """Fused (encoder+Linear1) -> ReLU -> Linear2, lane-dense padded output."""
    hdim = wc_ref.shape[1]          # classifier hidden (128)
    ncols = out_ref.shape[1]        # num_classes padded to 128

    x = x_ref[...]                                                 # [B, F] bf16
    # h = relu(x @ Wc + bc)   (f32 MXU accumulate, f32 VPU bias/ReLU)
    h = jnp.dot(x, wc_ref[...], preferred_element_type=jnp.float32)
    h = jnp.maximum(h + bias_ref[0:1, :hdim], 0.0)                 # [B, 128] f32
    # y = h @ W2p + b2p       (feed MXU bf16, accumulate f32)
    y = jnp.dot(h.astype(w2_ref.dtype), w2_ref[...],
                preferred_element_type=jnp.float32)
    out_ref[...] = y + bias_ref[1:2, :ncols]                       # [B, 128] f32


def prepare_params(params):
    """ONE-TIME parameter prep: fold, pad, pack, cast.  NOT on the per-call path.

    Returns (wc_bf16 [F,hidden], w2_bf16 [hidden,n_pad], bias_f32 [2,width]).
    """
    we, be, w1, b1, w2, b2 = params
    hidden = w1.shape[1]
    num_classes = w2.shape[1]
    n_pad = ((num_classes + 127) // 128) * 128
    h_pad = ((hidden + 127) // 128) * 128

    # Fold encoder Linear into classifier Linear1 (no nonlinearity between them).
    # TODO(synk): valid only while the user-provided PyTorch `encoder` is a pure
    #             affine Linear; any nonlinearity/norm/dropout breaks the fold.
    wc = jnp.dot(we, w1)                                           # [F, hidden] f32
    bc = jnp.dot(be, w1) + b1                                      # [hidden]    f32
    # Pad classifier Linear2 to a lane-dense 128-wide output.
    w2_pad = jnp.zeros((hidden, n_pad), jnp.float32).at[:, :num_classes].set(w2)
    # Pack both bias vectors into a single (2, width) f32 input (one DMA).
    bias_w = max(h_pad, n_pad)
    bias = jnp.zeros((2, bias_w), jnp.float32)
    bias = bias.at[0, :hidden].set(bc)
    bias = bias.at[1, :num_classes].set(b2)

    # bf16 MXU operands; f32 accumulation happens inside the kernel.
    wc_bf = wc.astype(jnp.bfloat16)
    w2_bf = w2_pad.astype(jnp.bfloat16)
    return jax.block_until_ready((wc_bf, w2_bf, bias))


@functools.partial(jax.jit, static_argnames=("num_classes",))
def latent_classifier_forward(x_nchw, wc_bf, w2_bf, bias, *, num_classes):
    """Per-call path: reshape -> single bf16 cast -> pallas_call -> slice.

    All of this is under one jit so the glue ops fuse around the custom call.
    """
    B = x_nchw.shape[0]
    x_bf = x_nchw.reshape(B, -1).astype(jnp.bfloat16)              # single cast
    F = x_bf.shape[1]
    hidden = wc_bf.shape[1]
    n_pad = w2_bf.shape[1]

    # Small shapes: every operand fits in VMEM as a single full-array block,
    # so no grid / tiling is needed (full-array blocks satisfy the (8,128)
    # rule because block_shape == array shape).
    vmem_spec = pl.BlockSpec(memory_space=pltpu.MemorySpace.VMEM)
    cost = pl.CostEstimate(
        flops=2 * B * (F * hidden + hidden * n_pad),
        transcendentals=0,
        bytes_accessed=(x_bf.size * 2 + wc_bf.size * 2 + w2_bf.size * 2
                        + bias.size * 4 + B * n_pad * 4),
    )
    out_pad = pl.pallas_call(
        latent_classifier_kernel,
        out_shape=jax.ShapeDtypeStruct((B, n_pad), jnp.float32),
        in_specs=[vmem_spec] * 4,
        out_specs=vmem_spec,
        cost_estimate=cost,
    )(x_bf, wc_bf, w2_bf, bias)
    return out_pad[:, :num_classes]                                # glue slice


def init_params(key, in_features, latent_dim, hidden, num_classes):
    """Deterministic, PyTorch-Linear-style uniform(-1/sqrt(fan_in), +) init."""
    ks = jax.random.split(key, 6)

    def lin(kw, kb, fan_in, fan_out):
        bound = 1.0 / jnp.sqrt(jnp.float32(fan_in))
        w = jax.random.uniform(kw, (fan_in, fan_out), jnp.float32, -bound, bound)
        b = jax.random.uniform(kb, (fan_out,), jnp.float32, -bound, bound)
        return w, b

    # encoder: Linear(in_features, latent_dim)
    # TODO(synk): the PyTorch `encoder` is user-provided; a linear projection
    #             stands in for it here (this is also what makes the
    #             encoder/Linear1 fold valid).
    we, be = lin(ks[0], ks[1], in_features, latent_dim)
    # ClassifierHead: Linear(latent_dim, 128) -> ReLU -> Linear(128, num_classes)
    w1, b1 = lin(ks[2], ks[3], latent_dim, hidden)
    w2, b2 = lin(ks[4], ks[5], hidden, num_classes)
    return we, be, w1, b1, w2, b2


def reference_forward(x_nchw, params):
    """Un-fused f32 reference matching the original PyTorch module math."""
    we, be, w1, b1, w2, b2 = params
    x = x_nchw.reshape(x_nchw.shape[0], -1).astype(jnp.float32)
    z = x @ we + be
    h = jnp.maximum(z @ w1 + b1, 0.0)
    return h @ w2 + b2


if __name__ == "__main__":
    B, C, H, W = 2, 4, 16, 16
    latent_dim, hidden, num_classes = 32, 128, 10
    in_features = C * H * W

    key = jax.random.PRNGKey(0)
    kx, kp = jax.random.split(key)
    x = jax.random.normal(kx, (B, C, H, W), jnp.float32)
    params = init_params(kp, in_features, latent_dim, hidden, num_classes)

    # One-time prep (fold / pad / pack / cast) — NOT part of the per-call cost.
    wc_bf, w2_bf, bias = prepare_params(params)

    out = latent_classifier_forward(x, wc_bf, w2_bf, bias,
                                    num_classes=num_classes)
    out = jax.block_until_ready(out)

    ref = reference_forward(x, params)
    assert out.shape == (B, num_classes)
    # Tolerance loosened vs pure f32: MXU operands are bf16 (f32 accumulation),
    # and the encoder fold changes accumulation order.
    assert jnp.allclose(out, ref, atol=2e-2, rtol=2e-2), "mismatch vs reference"
    print("KERNEL_OK")
</pallas_src>

<mosaic_0001>
module attributes {stable_mosaic.version = 11 : i64} {
  func.func @latent_classifier_kernel(%arg0: memref<2x1024xbf16, #tpu.memory_space<vmem>>, %arg1: memref<1024x128xbf16, #tpu.memory_space<vmem>>, %arg2: memref<128x128xbf16, #tpu.memory_space<vmem>>, %arg3: memref<2x128xf32, #tpu.memory_space<vmem>>, %arg4: memref<2x128xf32, #tpu.memory_space<vmem>>) attributes {dimension_semantics = [], scalar_prefetch = 0 : i64, scratch_operands = 0 : i64, tpu.core_type = #tpu.core_type<tc>} {
    %c0 = arith.constant 0 : index
    %c0_0 = arith.constant 0 : index
    %0 = vector.load %arg0[%c0, %c0_0] : memref<2x1024xbf16, #tpu.memory_space<vmem>>, vector<2x1024xbf16>
    %c0_1 = arith.constant 0 : index
    %c0_2 = arith.constant 0 : index
    %1 = vector.load %arg1[%c0_1, %c0_2] : memref<1024x128xbf16, #tpu.memory_space<vmem>>, vector<1024x128xbf16>
    %cst = arith.constant dense<0.000000e+00> : vector<2x128xf32>
    %2 = tpu.matmul %0, %1, %cst {dimension_numbers = #tpu.dot_dimension_numbers<[1], [0], [0], [1], [0, 0, 1, 1], [], []>} : vector<2x1024xbf16>, vector<1024x128xbf16>, vector<2x128xf32> -> vector<2x128xf32>
    %c0_3 = arith.constant 0 : index
    %c0_4 = arith.constant 0 : index
    %3 = vector.load %arg3[%c0_3, %c0_4] : memref<2x128xf32, #tpu.memory_space<vmem>>, vector<1x128xf32>
    %4 = vector.broadcast %3 : vector<1x128xf32> to vector<2x128xf32>
    %5 = arith.addf %2, %4 : vector<2x128xf32>
    %cst_5 = arith.constant 0.000000e+00 : f32
    %6 = vector.broadcast %cst_5 : f32 to vector<2x128xf32>
    %7 = arith.maximumf %5, %6 : vector<2x128xf32>
    %8 = arith.truncf %7 : vector<2x128xf32> to vector<2x128xbf16>
    %c0_6 = arith.constant 0 : index
    %c0_7 = arith.constant 0 : index
    %9 = vector.load %arg2[%c0_6, %c0_7] : memref<128x128xbf16, #tpu.memory_space<vmem>>, vector<128x128xbf16>
    %cst_8 = arith.constant dense<0.000000e+00> : vector<2x128xf32>
    %10 = tpu.matmul %8, %9, %cst_8 {dimension_numbers = #tpu.dot_dimension_numbers<[1], [0], [0], [1], [0, 0, 1, 1], [], []>} : vector<2x128xbf16>, vector<128x128xbf16>, vector<2x128xf32> -> vector<2x128xf32>
    %c1 = arith.constant 1 : index
    %c0_9 = arith.constant 0 : index
    %11 = vector.load %arg3[%c1, %c0_9] : memref<2x128xf32, #tpu.memory_space<vmem>>, vector<1x128xf32>
    %12 = vector.broadcast %11 : vector<1x128xf32> to vector<2x128xf32>
    %13 = arith.addf %10, %12 : vector<2x128xf32>
    %c0_10 = arith.constant 0 : index
    %c0_11 = arith.constant 0 : index
    %14 = vector.load %arg4[%c0_10, %c0_11] : memref<2x128xf32, #tpu.memory_space<vmem>>, vector<2x128xf32>
    tpu.vector_store %arg4[%c0_10, %c0_11], %13 {strides = array<i32>} : memref<2x128xf32, #tpu.memory_space<vmem>>, vector<2x128xf32>,
    return
  }
}

</mosaic_0001>

<llo_original>
// kernel: latent_classifier_forward.1
$region0: #{latent_classifier_forward.1}
  #allocation0 [shape = 'u32[]', space=smem, size = 0x4, offset = 0x4, fixed_abs, tag = 'smem constant byte address 0x4 - core index']
  #allocation1 [shape = 'u32[144,128]{1,0:T(1,128)}', space=vmem, size = 0x12000, scoped, tag = 'internal scratch']
  %s0 = inlined_call_operand.vmem [shape: bf16[2,1024], index: 0, kind: input, shape index: {}]
  %s1 = inlined_call_operand.hbm [shape: bf16[1024,128], index: 1, kind: input, shape index: {}]
  %s2 = inlined_call_operand.vmem [shape: bf16[128,128], index: 2, kind: input, shape index: {}]
  %s3 = inlined_call_operand.vmem [shape: f32[2,128], index: 3, kind: input, shape index: {}]
  %s4 = inlined_call_operand.hbm [shape: f32[2,128], index: 4, kind: output, shape index: {}]
  %s5 = sld [smem:[#allocation0]]
  $region30: #{latent_classifier_forward.1} parent=0
    _
  %s7 = ssub.s32 1, %s5
  %s8 = scalar_select 0, %s7, %s5
  $region1: #{latent_classifier_forward.1} parent=0
    #allocation2 [shape = 'u8[262144]{0}', space=vmem, size = 0x40000, scoped, tag = 'input window, operand 1, single buffered']
    #allocation3 [shape = 's32[1]{0}', space=sflag, size = 0x4, scoped, tag = 'scoped memory for latent_classifier_forward.1']
    #allocation4 [shape = 's32[1]{0}', space=sflag, size = 0x4, scoped, tag = 'scoped memory for latent_classifier_forward.1']
    #allocation5 [shape = 'u8[1024]{0}', space=vmem, size = 0x400, scoped, tag = 'output window, operand 0, single buffered']
    %9 = vsyncpa [#allocation3], 0
    %10 = vsyncpa [#allocation4], 0
    // Predicated region
    $region2: #{latent_classifier_forward.1} parent=1 // pred_check
      _
    $region3: #{latent_classifier_forward.1} parent=1 // pred_check_branch
      %12 = sbr.rel (0) target = $region5
    $region4: #{latent_classifier_forward.1} parent=1 // pred_region
      _
    $region5: #{latent_classifier_forward.1} parent=1 // pred_fallthru
      _
    // Predicated region
    $region6: #{latent_classifier_forward.1} parent=1 // pred_check
      _
    $region7: #{latent_classifier_forward.1} parent=1 // pred_check_branch
      %14 = sbr.rel (0) target = $region9
    $region8: #{latent_classifier_forward.1} parent=1 // pred_region
      %s16 = ssub.s32 8192, 8192
      %17 = vsyncadd [#allocation3], %s16
      %s18 = sshll.u32 [#allocation2], 4
      %s19 = int_to_ptr.vmem [resolvable:$true] %s18
      %24 = dma.hbm_to_vmem [thread:$0]  %s1, 8192, %s19, [#allocation3], 64, 64, 4
    $region9: #{latent_classifier_forward.1} parent=1 // pred_fallthru
      _
    // Predicated region
    $region10: #{latent_classifier_forward.1} parent=1 // pred_check
      _
    $region11: #{latent_classifier_forward.1} parent=1 // pred_check_branch
      %26 = sbr.rel (0) target = $region13
    $region12: #{latent_classifier_forward.1} parent=1 // pred_region
      _
    $region13: #{latent_classifier_forward.1} parent=1 // pred_fallthru
      _
    // Predicated region
    $region14: #{latent_classifier_forward.1} parent=1 // pred_check
      _
    $region15: #{latent_classifier_forward.1} parent=1 // pred_check_branch
      %28 = sbr.rel (0) target = $region17
    $region16: #{latent_classifier_forward.1} parent=1 // pred_region
      _
    $region17: #{latent_classifier_forward.1} parent=1 // pred_fallthru
      _
    // Predicated region
    $region18: #{latent_classifier_forward.1} parent=1 // pred_check
      _
    $region19: #{latent_classifier_forward.1} parent=1 // pred_check_branch
      %30 = sbr.rel (0) target = $region21
    $region20: #{latent_classifier_forward.1} parent=1 // pred_region
      %31 = dma.done [#allocation3], 8192
    $region21: #{latent_classifier_forward.1} parent=1 // pred_fallthru
      _
    %v33 = vld [vmem:[%s0] sm:$0xff]
    %v34 = vld [vmem:[#allocation2] sm:$0xf]
    %v35 = vld [vmem:[#allocation2 + $0x4] sm:$0xf]
    %v36 = vld [vmem:[#allocation2 + $0x8] sm:$0xf]
    %v37 = vld [vmem:[#allocation2 + $0xc] sm:$0xf]
    %v38 = vld [vmem:[#allocation2 + $0x10] sm:$0xf]
    %v39 = vld [vmem:[#allocation2 + $0x14] sm:$0xf]
    %v40 = vld [vmem:[#allocation2 + $0x18] sm:$0xf]
    %v41 = vld [vmem:[#allocation2 + $0x1c] sm:$0xf]
    %v42 = vld [vmem:[#allocation2 + $0x20] sm:$0xf]
    %v43 = vld [vmem:[#allocation2 + $0x24] sm:$0xf]
    %v44 = vld [vmem:[#allocation2 + $0x28] sm:$0xf]
    %v45 = vld [vmem:[#allocation2 + $0x2c] sm:$0xf]
    %v46 = vld [vmem:[#allocation2 + $0x30] sm:$0xf]
    %v47 = vld [vmem:[#allocation2 + $0x34] sm:$0xf]
    %v48 = vld [vmem:[#allocation2 + $0x38] sm:$0xf]
    %v49 = vld [vmem:[#allocation2 + $0x3c] sm:$0xf]
    %v50 = vld [vmem:[#allocation2 + $0x40] sm:$0xf]
    %v51 = vld [vmem:[#allocation2 + $0x44] sm:$0xf]
    %v52 = vld [vmem:[#allocation2 + $0x48] sm:$0xf]
    %v53 = vld [vmem:[#allocation2 + $0x4c] sm:$0xf]
    %v54 = vld [vmem:[#allocation2 + $0x50] sm:$0xf]
    %v55 = vld [vmem:[#allocation2 + $0x54] sm:$0xf]
    %v56 = vld [vmem:[#allocation2 + $0x58] sm:$0xf]
    %v57 = vld [vmem:[#allocation2 + $0x5c] sm:$0xf]
    %v58 = vld [vmem:[#allocation2 + $0x60] sm:$0xf]
    %v59 = vld [vmem:[#allocation2 + $0x64] sm:$0xf]
    %v60 = vld [vmem:[#allocation2 + $0x68] sm:$0xf]
    %v61 = vld [vmem:[#allocation2 + $0x6c] sm:$0xf]
    %v62 = vld [vmem:[#allocation2 + $0x70] sm:$0xf]
    %v63 = vld [vmem:[#allocation2 + $0x74] sm:$0xf]
    %v64 = vld [vmem:[#allocation2 + $0x78] sm:$0xf]
    %v65 = vld [vmem:[#allocation2 + $0x7c] sm:$0xf]
    %v66 = vld [vmem:[#allocation2 + $0x80] sm:$0xf]
    %v67 = vld [vmem:[#allocation2 + $0x84] sm:$0xf]
    %v68 = vld [vmem:[#allocation2 + $0x88] sm:$0xf]
    %v69 = vld [vmem:[#allocation2 + $0x8c] sm:$0xf]
    %v70 = vld [vmem:[#allocation2 + $0x90] sm:$0xf]
    %v71 = vld [vmem:[#allocation2 + $0x94] sm:$0xf]
    %v72 = vld [vmem:[#allocation2 + $0x98] sm:$0xf]
    %v73 = vld [vmem:[#allocation2 + $0x9c] sm:$0xf]
    %v74 = vld [vmem:[#allocation2 + $0xa0] sm:$0xf]
    %v75 = vld [vmem:[#allocation2 + $0xa4] sm:$0xf]
    %v76 = vld [vmem:[#allocation2 + $0xa8] sm:$0xf]
    %v77 = vld [vmem:[#allocation2 + $0xac] sm:$0xf]
    %v78 = vld [vmem:[#allocation2 + $0xb0] sm:$0xf]
    %v79 = vld [vmem:[#allocation2 + $0xb4] sm:$0xf]
    %v80 = vld [vmem:[#allocation2 + $0xb8] sm:$0xf]
    %v81 = vld [vmem:[#allocation2 + $0xbc] sm:$0xf]
    %v82 = vld [vmem:[#allocation2 + $0xc0] sm:$0xf]
    %v83 = vld [vmem:[#allocation2 + $0xc4] sm:$0xf]
    %v84 = vld [vmem:[#allocation2 + $0xc8] sm:$0xf]
    %v85 = vld [vmem:[#allocation2 + $0xcc] sm:$0xf]
    %v86 = vld [vmem:[#allocation2 + $0xd0] sm:$0xf]
    %v87 = vld [vmem:[#allocation2 + $0xd4] sm:$0xf]
    %v88 = vld [vmem:[#allocation2 + $0xd8] sm:$0xf]
    %v89 = vld [vmem:[#allocation2 + $0xdc] sm:$0xf]
    %v90 = vld [vmem:[#allocation2 + $0xe0] sm:$0xf]
    %v91 = vld [vmem:[#allocation2 + $0xe4] sm:$0xf]
    %v92 = vld [vmem:[#allocation2 + $0xe8] sm:$0xf]
    %v93 = vld [vmem:[#allocation2 + $0xec] sm:$0xf]
    %v94 = vld [vmem:[#allocation2 + $0xf0] sm:$0xf]
    %v95 = vld [vmem:[#allocation2 + $0xf4] sm:$0xf]
    %v96 = vld [vmem:[#allocation2 + $0xf8] sm:$0xf]
    %v97 = vld [vmem:[#allocation2 + $0xfc] sm:$0xf]
    %v98 = vld [vmem:[#allocation2 + $0x100] sm:$0xf]
    %v99 = vld [vmem:[#allocation2 + $0x104] sm:$0xf]
    %v100 = vld [vmem:[#allocation2 + $0x108] sm:$0xf]
    %v101 = vld [vmem:[#allocation2 + $0x10c] sm:$0xf]
    %v102 = vld [vmem:[#allocation2 + $0x110] sm:$0xf]
    %v103 = vld [vmem:[#allocation2 + $0x114] sm:$0xf]
    %v104 = vld [vmem:[#allocation2 + $0x118] sm:$0xf]
    %v105 = vld [vmem:[#allocation2 + $0x11c] sm:$0xf]
    %v106 = vld [vmem:[#allocation2 + $0x120] sm:$0xf]
    %v107 = vld [vmem:[#allocation2 + $0x124] sm:$0xf]
    %v108 = vld [vmem:[#allocation2 + $0x128] sm:$0xf]
    %v109 = vld [vmem:[#allocation2 + $0x12c] sm:$0xf]
    %v110 = vld [vmem:[#allocation2 + $0x130] sm:$0xf]
    %v111 = vld [vmem:[#allocation2 + $0x134] sm:$0xf]
    %v112 = vld [vmem:[#allocation2 + $0x138] sm:$0xf]
    %v113 = vld [vmem:[#allocation2 + $0x13c] sm:$0xf]
    %v114 = vld [vmem:[#allocation2 + $0x140] sm:$0xf]
    %v115 = vld [vmem:[#allocation2 + $0x144] sm:$0xf]
    %v116 = vld [vmem:[#allocation2 + $0x148] sm:$0xf]
    %v117 = vld [vmem:[#allocation2 + $0x14c] sm:$0xf]
    %v118 = vld [vmem:[#allocation2 + $0x150] sm:$0xf]
    %v119 = vld [vmem:[#allocation2 + $0x154] sm:$0xf]
    %v120 = vld [vmem:[#allocation2 + $0x158] sm:$0xf]
    %v121 = vld [vmem:[#allocation2 + $0x15c] sm:$0xf]
    %v122 = vld [vmem:[#allocation2 + $0x160] sm:$0xf]
    %v123 = vld [vmem:[#allocation2 + $0x164] sm:$0xf]
    %v124 = vld [vmem:[#allocation2 + $0x168] sm:$0xf]
    %v125 = vld [vmem:[#allocation2 + $0x16c] sm:$0xf]
    %v126 = vld [vmem:[#allocation2 + $0x170] sm:$0xf]
    %v127 = vld [vmem:[#allocation2 + $0x174] sm:$0xf]
    %v128 = vld [vmem:[#allocation2 + $0x178] sm:$0xf]
    %v129 = vld [vmem:[#allocation2 + $0x17c] sm:$0xf]
    %v130 = vld [vmem:[#allocation2 + $0x180] sm:$0xf]
    %v131 = vld [vmem:[#allocation2 + $0x184] sm:$0xf]
    %v132 = vld [vmem:[#allocation2 + $0x188] sm:$0xf]
    %v133 = vld [vmem:[#allocation2 + $0x18c] sm:$0xf]
    %v134 = vld [vmem:[#allocation2 + $0x190] sm:$0xf]
    %v135 = vld [vmem:[#allocation2 + $0x194] sm:$0xf]
    %v136 = vld [vmem:[#allocation2 + $0x198] sm:$0xf]
    %v137 = vld [vmem:[#allocation2 + $0x19c] sm:$0xf]
    %v138 = vld [vmem:[#allocation2 + $0x1a0] sm:$0xf]
    %v139 = vld [vmem:[#allocation2 + $0x1a4] sm:$0xf]
    %v140 = vld [vmem:[#allocation2 + $0x1a8] sm:$0xf]
    %v141 = vld [vmem:[#allocation2 + $0x1ac] sm:$0xf]
    %v142 = vld [vmem:[#allocation2 + $0x1b0] sm:$0xf]
    %v143 = vld [vmem:[#allocation2 + $0x1b4] sm:$0xf]
    %v144 = vld [vmem:[#allocation2 + $0x1b8] sm:$0xf]
    %v145 = vld [vmem:[#allocation2 + $0x1bc] sm:$0xf]
    %v146 = vld [vmem:[#allocation2 + $0x1c0] sm:$0xf]
    %v147 = vld [vmem:[#allocation2 + $0x1c4] sm:$0xf]
    %v148 = vld [vmem:[#allocation2 + $0x1c8] sm:$0xf]
    %v149 = vld [vmem:[#allocation2 + $0x1cc] sm:$0xf]
    %v150 = vld [vmem:[#allocation2 + $0x1d0] sm:$0xf]
    %v151 = vld [vmem:[#allocation2 + $0x1d4] sm:$0xf]
    %v152 = vld [vmem:[#allocation2 + $0x1d8] sm:$0xf]
    %v153 = vld [vmem:[#allocation2 + $0x1dc] sm:$0xf]
    %v154 = vld [vmem:[#allocation2 + $0x1e0] sm:$0xf]
    %v155 = vld [vmem:[#allocation2 + $0x1e4] sm:$0xf]
    %v156 = vld [vmem:[#allocation2 + $0x1e8] sm:$0xf]
    %v157 = vld [vmem:[#allocation2 + $0x1ec] sm:$0xf]
    %v158 = vld [vmem:[#allocation2 + $0x1f0] sm:$0xf]
    %v159 = vld [vmem:[#allocation2 + $0x1f4] sm:$0xf]
    %v160 = vld [vmem:[#allocation2 + $0x1f8] sm:$0xf]
    %v161 = vld [vmem:[#allocation2 + $0x1fc] sm:$0xf]
    %v162 = vld [vmem:[%s3] sm:$0x1]
    %v163 = vlaneseq
    %v164 = vshrl.u32 %v163, 7
    %v165 = vsub.s32 0, %v164
    %v166 = vrot.slane %v162, %v165
    %v168 = vcombine.high %v33, %v33
    %v170 = vunpack.c.l.s4 1966171168
    %v171 = vunpack.c.0.s8 %v170
    %v172 = vlaneseq
    %v173 = vshrl.u32 %v172, 7
    %v174 = vsub.s32 %v171, %v173
    %v175 = vrot.slane %v33, %v174
    %v177 = vunpack.c.l.s4 1966171168
    %v178 = vunpack.c.0.s8 %v177
    %v179 = vlaneseq
    %v180 = vshrl.u32 %v179, 7
    %v181 = vsub.s32 %v178, %v180
    %v182 = vrot.slane %v168, %v181
    %v183 = vcombine.high %v175, %v175
    %v184 = vcombine.high %v182, %v182
    %v186 = vunpack.c.l.s4 1966171168
    %v187 = vunpack.c.0.s8 %v186
    %v188 = vlaneseq
    %v189 = vshrl.u32 %v188, 7
    %v190 = vsub.s32 %v187, %v189
    %v191 = vrot.slane %v175, %v190
    %v193 = vunpack.c.l.s4 1966171168
    %v194 = vunpack.c.0.s8 %v193
    %v195 = vlaneseq
    %v196 = vshrl.u32 %v195, 7
    %v197 = vsub.s32 %v194, %v196
    %v198 = vrot.slane %v182, %v197
    %v200 = vunpack.c.l.s4 1966171168
    %v201 = vunpack.c.0.s8 %v200
    %v202 = vlaneseq
    %v203 = vshrl.u32 %v202, 7
    %v204 = vsub.s32 %v201, %v203
    %v205 = vrot.slane %v183, %v204
    %v207 = vunpack.c.l.s4 1966171168
    %v208 = vunpack.c.0.s8 %v207
    %v209 = vlaneseq
    %v210 = vshrl.u32 %v209, 7
    %v211 = vsub.s32 %v208, %v210
    %v212 = vrot.slane %v184, %v211
    %v213 = vcombine.high %v191, %v191
    %v214 = vcombine.high %v198, %v198
    %v215 = vcombine.high %v205, %v205
    %v216 = vcombine.high %v212, %v212
    %v353 = vunpack.c.l.b16 %v34
    %v354 = vunpack.c.l.b16 %v35
    %v355 = vunpack.c.l.b16 %v36
    %v356 = vunpack.c.l.b16 %v37
    %v357 = vunpack.c.l.b16 %v38
    %v358 = vunpack.c.l.b16 %v39
    %v359 = vunpack.c.l.b16 %v40
    %v360 = vunpack.c.l.b16 %v41
    %v361 = vunpack.c.l.b16 %v42
    %v362 = vunpack.c.l.b16 %v43
    %v363 = vunpack.c.l.b16 %v44
    %v364 = vunpack.c.l.b16 %v45
    %v365 = vunpack.c.l.b16 %v46
    %v366 = vunpack.c.l.b16 %v47
    %v367 = vunpack.c.l.b16 %v48
    %v368 = vunpack.c.l.b16 %v49
    %v369 = vunpack.c.l.b16 %v50
    %v370 = vunpack.c.l.b16 %v51
    %v371 = vunpack.c.l.b16 %v52
    %v372 = vunpack.c.l.b16 %v53
    %v373 = vunpack.c.l.b16 %v54
    %v374 = vunpack.c.l.b16 %v55
    %v375 = vunpack.c.l.b16 %v56
    %v376 = vunpack.c.l.b16 %v57
    %v377 = vunpack.c.l.b16 %v58
    %v378 = vunpack.c.l.b16 %v59
    %v379 = vunpack.c.l.b16 %v60
    %v380 = vunpack.c.l.b16 %v61
    %v381 = vunpack.c.l.b16 %v62
    %v382 = vunpack.c.l.b16 %v63
    %v383 = vunpack.c.l.b16 %v64
    %v384 = vunpack.c.l.b16 %v65
    %v385 = vunpack.c.l.b16 %v66
    %v386 = vunpack.c.l.b16 %v67
    %v387 = vunpack.c.l.b16 %v68
    %v388 = vunpack.c.l.b16 %v69
    %v389 = vunpack.c.l.b16 %v70
    %v390 = vunpack.c.l.b16 %v71
    %v391 = vunpack.c.l.b16 %v72
    %v392 = vunpack.c.l.b16 %v73
    %v393 = vunpack.c.l.b16 %v74
    %v394 = vunpack.c.l.b16 %v75
    %v395 = vunpack.c.l.b16 %v76
    %v396 = vunpack.c.l.b16 %v77
    %v397 = vunpack.c.l.b16 %v78
    %v398 = vunpack.c.l.b16 %v79
    %v399 = vunpack.c.l.b16 %v80
    %v400 = vunpack.c.l.b16 %v81
    %v401 = vunpack.c.l.b16 %v82
    %v402 = vunpack.c.l.b16 %v83
    %v403 = vunpack.c.l.b16 %v84
    %v404 = vunpack.c.l.b16 %v85
    %v405 = vunpack.c.l.b16 %v86
    %v406 = vunpack.c.l.b16 %v87
    %v407 = vunpack.c.l.b16 %v88
    %v408 = vunpack.c.l.b16 %v89
    %v409 = vunpack.c.l.b16 %v90
    %v410 = vunpack.c.l.b16 %v91
    %v411 = vunpack.c.l.b16 %v92
    %v412 = vunpack.c.l.b16 %v93
    %v413 = vunpack.c.l.b16 %v94
    %v414 = vunpack.c.l.b16 %v95
    %v415 = vunpack.c.l.b16 %v96
    %v416 = vunpack.c.l.b16 %v97
    %v417 = vunpack.c.l.b16 %v98
    %v418 = vunpack.c.l.b16 %v99
    %v419 = vunpack.c.l.b16 %v100
    %v420 = vunpack.c.l.b16 %v101
    %v421 = vunpack.c.l.b16 %v102
    %v422 = vunpack.c.l.b16 %v103
    %v423 = vunpack.c.l.b16 %v104
    %v424 = vunpack.c.l.b16 %v105
    %v425 = vunpack.c.l.b16 %v106
    %v426 = vunpack.c.l.b16 %v107
    %v427 = vunpack.c.l.b16 %v108
    %v428 = vunpack.c.l.b16 %v109
    %v429 = vunpack.c.l.b16 %v110
    %v430 = vunpack.c.l.b16 %v111
    %v431 = vunpack.c.l.b16 %v112
    %v432 = vunpack.c.l.b16 %v113
    %v433 = vunpack.c.l.b16 %v114
    %v434 = vunpack.c.l.b16 %v115
    %v435 = vunpack.c.l.b16 %v116
    %v436 = vunpack.c.l.b16 %v117
    %v437 = vunpack.c.l.b16 %v118
    %v438 = vunpack.c.l.b16 %v119
    %v439 = vunpack.c.l.b16 %v120
    %v440 = vunpack.c.l.b16 %v121
    %v441 = vunpack.c.l.b16 %v122
    %v442 = vunpack.c.l.b16 %v123
    %v443 = vunpack.c.l.b16 %v124
    %v444 = vunpack.c.l.b16 %v125
    %v445 = vunpack.c.l.b16 %v126
    %v446 = vunpack.c.l.b16 %v127
    %v447 = vunpack.c.l.b16 %v128
    %v448 = vunpack.c.l.b16 %v129
    %v449 = vunpack.c.l.b16 %v130
    %v450 = vunpack.c.l.b16 %v131
    %v451 = vunpack.c.l.b16 %v132
    %v452 = vunpack.c.l.b16 %v133
    %v453 = vunpack.c.l.b16 %v134
    %v454 = vunpack.c.l.b16 %v135
    %v455 = vunpack.c.l.b16 %v136
    %v456 = vunpack.c.l.b16 %v137
    %v457 = vunpack.c.l.b16 %v138
    %v458 = vunpack.c.l.b16 %v139
    %v459 = vunpack.c.l.b16 %v140
    %v460 = vunpack.c.l.b16 %v141
    %v461 = vunpack.c.l.b16 %v142
    %v462 = vunpack.c.l.b16 %v143
    %v463 = vunpack.c.l.b16 %v144
    %v464 = vunpack.c.l.b16 %v145
    %v465 = vunpack.c.l.b16 %v146
    %v466 = vunpack.c.l.b16 %v147
    %v467 = vunpack.c.l.b16 %v148
    %v468 = vunpack.c.l.b16 %v149
    %v469 = vunpack.c.l.b16 %v150
    %v470 = vunpack.c.l.b16 %v151
    %v471 = vunpack.c.l.b16 %v152
    %v472 = vunpack.c.l.b16 %v153
    %v473 = vunpack.c.l.b16 %v154
    %v474 = vunpack.c.l.b16 %v155
    %v475 = vunpack.c.l.b16 %v156
    %v476 = vunpack.c.l.b16 %v157
    %v477 = vunpack.c.l.b16 %v158
    %v478 = vunpack.c.l.b16 %v159
    %v479 = vunpack.c.l.b16 %v160
    %v480 = vunpack.c.l.b16 %v161
    %v481 = vpack.c.b16 %v354, %v353
    %v482 = vpack.c.b16 %v356, %v355
    %v483 = vpack.c.b16 %v358, %v357
    %v484 = vpack.c.b16 %v360, %v359
    %v485 = vpack.c.b16 %v362, %v361
    %v486 = vpack.c.b16 %v364, %v363
    %v487 = vpack.c.b16 %v366, %v365
    %v488 = vpack.c.b16 %v368, %v367
    %v489 = vpack.c.b16 %v370, %v369
    %v490 = vpack.c.b16 %v372, %v371
    %v491 = vpack.c.b16 %v374, %v373
    %v492 = vpack.c.b16 %v376, %v375
    %v493 = vpack.c.b16 %v378, %v377
    %v494 = vpack.c.b16 %v380, %v379
    %v495 = vpack.c.b16 %v382, %v381
    %v496 = vpack.c.b16 %v384, %v383
    %v497 = vpack.c.b16 %v386, %v385
    %v498 = vpack.c.b16 %v388, %v387
    %v499 = vpack.c.b16 %v390, %v389
    %v500 = vpack.c.b16 %v392, %v391
    %v501 = vpack.c.b16 %v394, %v393
    %v502 = vpack.c.b16 %v396, %v395
    %v503 = vpack.c.b16 %v398, %v397
    %v504 = vpack.c.b16 %v400, %v399
    %v505 = vpack.c.b16 %v402, %v401
    %v506 = vpack.c.b16 %v404, %v403
    %v507 = vpack.c.b16 %v406, %v405
    %v508 = vpack.c.b16 %v408, %v407
    %v509 = vpack.c.b16 %v410, %v409
    %v510 = vpack.c.b16 %v412, %v411
    %v511 = vpack.c.b16 %v414, %v413
    %v512 = vpack.c.b16 %v416, %v415
    %v513 = vpack.c.b16 %v418, %v417
    %v514 = vpack.c.b16 %v420, %v419
    %v515 = vpack.c.b16 %v422, %v421
    %v516 = vpack.c.b16 %v424, %v423
    %v517 = vpack.c.b16 %v426, %v425
    %v518 = vpack.c.b16 %v428, %v427
    %v519 = vpack.c.b16 %v430, %v429
    %v520 = vpack.c.b16 %v432, %v431
    %v521 = vpack.c.b16 %v434, %v433
    %v522 = vpack.c.b16 %v436, %v435
    %v523 = vpack.c.b16 %v438, %v437
    %v524 = vpack.c.b16 %v440, %v439
    %v525 = vpack.c.b16 %v442, %v441
    %v526 = vpack.c.b16 %v444, %v443
    %v527 = vpack.c.b16 %v446, %v445
    %v528 = vpack.c.b16 %v448, %v447
    %v529 = vpack.c.b16 %v450, %v449
    %v530 = vpack.c.b16 %v452, %v451
    %v531 = vpack.c.b16 %v454, %v453
    %v532 = vpack.c.b16 %v456, %v455
    %v533 = vpack.c.b16 %v458, %v457
    %v534 = vpack.c.b16 %v460, %v459
    %v535 = vpack.c.b16 %v462, %v461
    %v536 = vpack.c.b16 %v464, %v463
    %v537 = vpack.c.b16 %v466, %v465
    %v538 = vpack.c.b16 %v468, %v467
    %v539 = vpack.c.b16 %v470, %v469
    %v540 = vpack.c.b16 %v472, %v471
    %v541 = vpack.c.b16 %v474, %v473
    %v542 = vpack.c.b16 %v476, %v475
    %v543 = vpack.c.b16 %v478, %v477
    %v544 = vpack.c.b16 %v480, %v479
    %609 = vmatprep.subr.bf16.mxu0 0
    %610 = vmatpush1.bf16.msra.mxu0 %v481
    %611 = vmatprep.subr.bf16.mxu0 0
    %612 = vmatpush1.bf16.msra.mxu0 %v482
    %613 = vmatprep.subr.bf16.mxu0 0
    %614 = vmatpush1.bf16.msra.mxu0 %v483
    %615 = vmatprep.subr.bf16.mxu0 0
    %616 = vmatpush1.bf16.msra.mxu0 %v484
    %617 = vmatprep.subr.bf16.mxu0 0
    %618 = vmatpush1.bf16.msra.mxu0 %v485
    %619 = vmatprep.subr.bf16.mxu0 0
    %620 = vmatpush1.bf16.msra.mxu0 %v486
    %621 = vmatprep.subr.bf16.mxu0 0
    %622 = vmatpush1.bf16.msra.mxu0 %v487
    %623 = vmatprep.subr.bf16.mxu0 0
    %624 = vmatpush1.bf16.msra.mxu0 %v488
    %625 = vmatprep.subr.bf16.mxu0 0
    %626 = vmatpush1.bf16.msra.mxu0 %v489
    %627 = vmatprep.subr.bf16.mxu0 0
    %628 = vmatpush1.bf16.msra.mxu0 %v490
    %629 = vmatprep.subr.bf16.mxu0 0
    %630 = vmatpush1.bf16.msra.mxu0 %v491
    %631 = vmatprep.subr.bf16.mxu0 0
    %632 = vmatpush1.bf16.msra.mxu0 %v492
    %633 = vmatprep.subr.bf16.mxu0 0
    %634 = vmatpush1.bf16.msra.mxu0 %v493
    %635 = vmatprep.subr.bf16.mxu0 0
    %636 = vmatpush1.bf16.msra.mxu0 %v494
    %637 = vmatprep.subr.bf16.mxu0 0
    %638 = vmatpush1.bf16.msra.mxu0 %v495
    %639 = vmatprep.subr.bf16.mxu0 0
    %640 = vmatpush1.bf16.msra.mxu0 %v496
    %641 = vmatprep.mubr.bf16.mxu0 %v205
    %642 = vmatmul.mubr.bf16.gmra.mrb[0].mxu0 %v191
    %v643 = vpop.f32.mrb[0].mxu0
    %v644 = vadd.f32 %v166, %v643
    %v645 = vpop.f32.mrb[0].mxu0
    %v646 = vpop.f32.mrb[0].mxu0
    %v647 = vpop.f32.mrb[0].mxu0
    %648 = vdwg.mxu0
    %649 = vmatprep.subr.bf16.mxu0 0
    %650 = vmatpush1.bf16.msra.mxu0 %v497
    %651 = vmatprep.subr.bf16.mxu0 0
    %652 = vmatpush1.bf16.msra.mxu0 %v498
    %653 = vmatprep.subr.bf16.mxu0 0
    %654 = vmatpush1.bf16.msra.mxu0 %v499
    %655 = vmatprep.subr.bf16.mxu0 0
    %656 = vmatpush1.bf16.msra.mxu0 %v500
    %657 = vmatprep.subr.bf16.mxu0 0
    %658 = vmatpush1.bf16.msra.mxu0 %v501
    %659 = vmatprep.subr.bf16.mxu0 0
    %660 = vmatpush1.bf16.msra.mxu0 %v502
    %661 = vmatprep.subr.bf16.mxu0 0
    %662 = vmatpush1.bf16.msra.mxu0 %v503
    %663 = vmatprep.subr.bf16.mxu0 0
    %664 = vmatpush1.bf16.msra.mxu0 %v504
    %665 = vmatprep.subr.bf16.mxu0 0
    %666 = vmatpush1.bf16.msra.mxu0 %v505
    %667 = vmatprep.subr.bf16.mxu0 0
    %668 = vmatpush1.bf16.msra.mxu0 %v506
    %669 = vmatprep.subr.bf16.mxu0 0
    %670 = vmatpush1.bf16.msra.mxu0 %v507
    %671 = vmatprep.subr.bf16.mxu0 0
    %672 = vmatpush1.bf16.msra.mxu0 %v508
    %673 = vmatprep.subr.bf16.mxu0 0
    %674 = vmatpush1.bf16.msra.mxu0 %v509
    %675 = vmatprep.subr.bf16.mxu0 0
    %676 = vmatpush1.bf16.msra.mxu0 %v510
    %677 = vmatprep.subr.bf16.mxu0 0
    %678 = vmatpush1.bf16.msra.mxu0 %v511
    %679 = vmatprep.subr.bf16.mxu0 0
    %680 = vmatpush1.bf16.msra.mxu0 %v512
    %681 = vmatprep.mubr.bf16.mxu0 %v215
    %682 = vmatmul.mubr.bf16.gmra.mrb[0].mxu0 %v213
    %v683 = vpop.f32.mrb[0].mxu0
    %v684 = vadd.f32 %v644, %v683
    %v685 = vpop.f32.mrb[0].mxu0
    %v686 = vpop.f32.mrb[0].mxu0
    %v687 = vpop.f32.mrb[0].mxu0
    %688 = vdwg.mxu0
    %689 = vmatprep.subr.bf16.mxu0 0
    %690 = vmatpush1.bf16.msra.mxu0 %v513
    %691 = vmatprep.subr.bf16.mxu0 0
    %692 = vmatpush1.bf16.msra.mxu0 %v514
    %693 = vmatprep.subr.bf16.mxu0 0
    %694 = vmatpush1.bf16.msra.mxu0 %v515
    %695 = vmatprep.subr.bf16.mxu0 0
    %696 = vmatpush1.bf16.msra.mxu0 %v516
    %697 = vmatprep.subr.bf16.mxu0 0
    %698 = vmatpush1.bf16.msra.mxu0 %v517
    %699 = vmatprep.subr.bf16.mxu0 0
    %700 = vmatpush1.bf16.msra.mxu0 %v518
    %701 = vmatprep.subr.bf16.mxu0 0
    %702 = vmatpush1.bf16.msra.mxu0 %v519
    %703 = vmatprep.subr.bf16.mxu0 0
    %704 = vmatpush1.bf16.msra.mxu0 %v520
    %705 = vmatprep.subr.bf16.mxu0 0
    %706 = vmatpush1.bf16.msra.mxu0 %v521
    %707 = vmatprep.subr.bf16.mxu0 0
    %708 = vmatpush1.bf16.msra.mxu0 %v522
    %709 = vmatprep.subr.bf16.mxu0 0
    %710 = vmatpush1.bf16.msra.mxu0 %v523
    %711 = vmatprep.subr.bf16.mxu0 0
    %712 = vmatpush1.bf16.msra.mxu0 %v524
    %713 = vmatprep.subr.bf16.mxu0 0
    %714 = vmatpush1.bf16.msra.mxu0 %v525
    %715 = vmatprep.subr.bf16.mxu0 0
    %716 = vmatpush1.bf16.msra.mxu0 %v526
    %717 = vmatprep.subr.bf16.mxu0 0
    %718 = vmatpush1.bf16.msra.mxu0 %v527
    %719 = vmatprep.subr.bf16.mxu0 0
    %720 = vmatpush1.bf16.msra.mxu0 %v528
    %721 = vmatprep.mubr.bf16.mxu0 %v212
    %722 = vmatmul.mubr.bf16.gmra.mrb[0].mxu0 %v198
    %v723 = vpop.f32.mrb[0].mxu0
    %v724 = vadd.f32 %v684, %v723
    %v725 = vpop.f32.mrb[0].mxu0
    %v726 = vpop.f32.mrb[0].mxu0
    %v727 = vpop.f32.mrb[0].mxu0
    %728 = vdwg.mxu0
    %729 = vmatprep.subr.bf16.mxu0 0
    %730 = vmatpush1.bf16.msra.mxu0 %v529
    %731 = vmatprep.subr.bf16.mxu0 0
    %732 = vmatpush1.bf16.msra.mxu0 %v530
    %733 = vmatprep.subr.bf16.mxu0 0
    %734 = vmatpush1.bf16.msra.mxu0 %v531
    %735 = vmatprep.subr.bf16.mxu0 0
    %736 = vmatpush1.bf16.msra.mxu0 %v532
    %737 = vmatprep.subr.bf16.mxu0 0
    %738 = vmatpush1.bf16.msra.mxu0 %v533
    %739 = vmatprep.subr.bf16.mxu0 0
    %740 = vmatpush1.bf16.msra.mxu0 %v534
    %741 = vmatprep.subr.bf16.mxu0 0
    %742 = vmatpush1.bf16.msra.mxu0 %v535
    %743 = vmatprep.subr.bf16.mxu0 0
    %744 = vmatpush1.bf16.msra.mxu0 %v536
    %745 = vmatprep.subr.bf16.mxu0 0
    %746 = vmatpush1.bf16.msra.mxu0 %v537
    %747 = vmatprep.subr.bf16.mxu0 0
    %748 = vmatpush1.bf16.msra.mxu0 %v538
    %749 = vmatprep.subr.bf16.mxu0 0
    %750 = vmatpush1.bf16.msra.mxu0 %v539
    %751 = vmatprep.subr.bf16.mxu0 0
    %752 = vmatpush1.bf16.msra.mxu0 %v540
    %753 = vmatprep.subr.bf16.mxu0 0
    %754 = vmatpush1.bf16.msra.mxu0 %v541
    %755 = vmatprep.subr.bf16.mxu0 0
    %756 = vmatpush1.bf16.msra.mxu0 %v542
    %757 = vmatprep.subr.bf16.mxu0 0
    %758 = vmatpush1.bf16.msra.mxu0 %v543
    %759 = vmatprep.subr.bf16.mxu0 0
    %760 = vmatpush1.bf16.msra.mxu0 %v544
    %761 = vmatprep.mubr.bf16.mxu0 %v216
    %762 = vmatmul.mubr.bf16.gmra.mrb[0].mxu0 %v214
    %v763 = vpop.f32.mrb[0].mxu0
    %v764 = vadd.f32 %v724, %v763
    %v765 = vpop.f32.mrb[0].mxu0
    %v766 = vpop.f32.mrb[0].mxu0
    %v767 = vpop.f32.mrb[0].mxu0
    %768 = vdwg.mxu0
    %v769 = vmax.f32 %v764, 0.0
    %v770 = vpack.c.bf16 %v769, %v769
    %v771 = vld [vmem:[%s2] sm:$0xf]
    %v772 = vld [vmem:[%s2 + $0x4] sm:$0xf]
    %v773 = vld [vmem:[%s2 + $0x8] sm:$0xf]
    %v774 = vld [vmem:[%s2 + $0xc] sm:$0xf]
    %v775 = vld [vmem:[%s2 + $0x10] sm:$0xf]
    %v776 = vld [vmem:[%s2 + $0x14] sm:$0xf]
    %v777 = vld [vmem:[%s2 + $0x18] sm:$0xf]
    %v778 = vld [vmem:[%s2 + $0x1c] sm:$0xf]
    %v779 = vld [vmem:[%s2 + $0x20] sm:$0xf]
    %v780 = vld [vmem:[%s2 + $0x24] sm:$0xf]
    %v781 = vld [vmem:[%s2 + $0x28] sm:$0xf]
    %v782 = vld [vmem:[%s2 + $0x2c] sm:$0xf]
    %v783 = vld [vmem:[%s2 + $0x30] sm:$0xf]
    %v784 = vld [vmem:[%s2 + $0x34] sm:$0xf]
    %v785 = vld [vmem:[%s2 + $0x38] sm:$0xf]
    %v786 = vld [vmem:[%s2 + $0x3c] sm:$0xf]
    %v787 = vld [vmem:[%s3 + $0x1] sm:$0x1]
    %v788 = vlaneseq
    %v789 = vshrl.u32 %v788, 7
    %v790 = vsub.s32 0, %v789
    %v791 = vrot.slane %v787, %v790
    %v808 = vunpack.c.l.b16 %v771
    %v809 = vunpack.c.l.b16 %v772
    %v810 = vunpack.c.l.b16 %v773
    %v811 = vunpack.c.l.b16 %v774
    %v812 = vunpack.c.l.b16 %v775
    %v813 = vunpack.c.l.b16 %v776
    %v814 = vunpack.c.l.b16 %v777
    %v815 = vunpack.c.l.b16 %v778
    %v816 = vunpack.c.l.b16 %v779
    %v817 = vunpack.c.l.b16 %v780
    %v818 = vunpack.c.l.b16 %v781
    %v819 = vunpack.c.l.b16 %v782
    %v820 = vunpack.c.l.b16 %v783
    %v821 = vunpack.c.l.b16 %v784
    %v822 = vunpack.c.l.b16 %v785
    %v823 = vunpack.c.l.b16 %v786
    %v824 = vpack.c.b16 %v809, %v808
    %v825 = vpack.c.b16 %v811, %v810
    %v826 = vpack.c.b16 %v813, %v812
    %v827 = vpack.c.b16 %v815, %v814
    %v828 = vpack.c.b16 %v817, %v816
    %v829 = vpack.c.b16 %v819, %v818
    %v830 = vpack.c.b16 %v821, %v820
    %v831 = vpack.c.b16 %v823, %v822
    %840 = vmatprep.subr.bf16.mxu0 0
    %841 = vmatpush1.bf16.msra.mxu0 %v824
    %842 = vmatprep.subr.bf16.mxu0 0
    %843 = vmatpush1.bf16.msra.mxu0 %v825
    %844 = vmatprep.subr.bf16.mxu0 0
    %845 = vmatpush1.bf16.msra.mxu0 %v826
    %846 = vmatprep.subr.bf16.mxu0 0
    %847 = vmatpush1.bf16.msra.mxu0 %v827
    %848 = vmatprep.subr.bf16.mxu0 0
    %849 = vmatpush1.bf16.msra.mxu0 %v828
    %850 = vmatprep.subr.bf16.mxu0 0
    %851 = vmatpush1.bf16.msra.mxu0 %v829
    %852 = vmatprep.subr.bf16.mxu0 0
    %853 = vmatpush1.bf16.msra.mxu0 %v830
    %854 = vmatprep.subr.bf16.mxu0 0
    %855 = vmatpush1.bf16.msra.mxu0 %v831
    %856 = vmatprep.subr.bf16.mxu0 0
    %857 = vmatpush1.bf16.msra.mxu0 0
    %858 = vmatprep.subr.bf16.mxu0 0
    %859 = vmatpush1.bf16.msra.mxu0 0
    %860 = vmatprep.subr.bf16.mxu0 0
    %861 = vmatpush1.bf16.msra.mxu0 0
    %862 = vmatprep.subr.bf16.mxu0 0
    %863 = vmatpush1.bf16.msra.mxu0 0
    %864 = vmatprep.subr.bf16.mxu0 0
    %865 = vmatpush1.bf16.msra.mxu0 0
    %866 = vmatprep.subr.bf16.mxu0 0
    %867 = vmatpush1.bf16.msra.mxu0 0
    %868 = vmatprep.subr.bf16.mxu0 0
    %869 = vmatpush1.bf16.msra.mxu0 0
    %870 = vmatprep.subr.bf16.mxu0 0
    %871 = vmatpush1.bf16.msra.mxu0 0
    %872 = vmatprep.mubr.bf16.mxu0 0
    %873 = vmatmul.mubr.bf16.gmra.mrb[0].mxu0 %v770
    %v874 = vpop.f32.mrb[0].mxu0
    %v875 = vadd.f32 %v791, %v874
    %v876 = vpop.f32.mrb[0].mxu0
    %v877 = vpop.f32.mrb[0].mxu0
    %v878 = vpop.f32.mrb[0].mxu0
    %879 = vdwg.mxu0
    %880 = vst [vmem:[#allocation5] sm:$0x3] %v875
    // Predicated region
    $region22: #{latent_classifier_forward.1} parent=1 // pred_check
      _
    $region23: #{latent_classifier_forward.1} parent=1 // pred_check_branch
      %882 = sbr.rel (0) target = $region25
    $region24: #{latent_classifier_forward.1} parent=1 // pred_region
      %s884 = ssub.s32 32, 32
      %885 = vsyncadd [#allocation4], %s884
      %s887 = sshll.u32 [#allocation5], 4
      %s888 = int_to_ptr.vmem [resolvable:$true] %s887
      %890 = dma.vmem_to_hbm [thread:$0]  %s888, 32, %s4, [#allocation4]
    $region25: #{latent_classifier_forward.1} parent=1 // pred_fallthru
      _
    // Predicated region
    $region26: #{latent_classifier_forward.1} parent=1 // pred_check
      _
    $region27: #{latent_classifier_forward.1} parent=1 // pred_check_branch
      %892 = sbr.rel (0) target = $region29
    $region28: #{latent_classifier_forward.1} parent=1 // pred_region
      %893 = dma.done [#allocation4], 32
    $region29: #{latent_classifier_forward.1} parent=1 // pred_fallthru
      _
    %894 = vsyncpa [#allocation3], 1
    %895 = vsyncpa [#allocation4], 1

</llo_original>
